<compile_context>
chip_gen: v6e
topology: v6e:2x2x1
jax: 0.10.0
libtpu: 0.0.40
codegen_flags: <defaults>
</compile_context>

<pallas_src>
import functools

import jax
import jax.numpy as jnp
from jax.experimental import pallas as pl
from jax.experimental.pallas import tpu as pltpu


def _scale_aware_kernel(x_ref, o_ref, *, temperature: float):
    # x_ref / o_ref: (TILE_ROWS, VOCAB) tile in VMEM. All math in f32.
    x = x_ref[...].astype(jnp.float32)

    # Per-row (lane-axis) reductions -> (TILE_ROWS, 1) scalars; cheap.
    norm = jnp.sqrt(jnp.sum(x * x, axis=-1, keepdims=True)) + 1e-10
    inv_norm = pl.reciprocal(norm, approx=False)             # per-row
    scale_factor = jnp.tanh(norm * (1.0 / temperature))      # per-row
    gate = jax.nn.sigmoid(norm - temperature)                # per-row

    # Per-element branch.
    scale = jnp.log1p(jnp.maximum(x, 0.0) * inv_norm) * scale_factor
    safe_scale = scale * (1.0 - gate) + gate
    # safe_scale >= 0  =>  (1 + safe_scale) >= 1, so the approx EUP reciprocal
    # is safe; this replaces a full-precision per-element divide.
    bounded = jnp.tanh(x * pl.reciprocal(1.0 + safe_scale, approx=True))
    probs = (bounded + 1.0) * 0.5

    denom = jnp.sum(probs, axis=-1, keepdims=True) + 1e-10
    o_ref[...] = (probs * pl.reciprocal(denom, approx=False)).astype(o_ref.dtype)


def _choose_tile_rows(rows: int, vocab: int, itemsize: int) -> int:
    # Sublane packing multiple for the in/out dtype (f32: 8, bf16: 16, int8: 32).
    mult = {4: 8, 2: 16, 1: 32}.get(int(itemsize), 8)
    # Aim for ~2 MiB of f32 work per grid step (per-step overhead ~0.35 us).
    target_block_bytes = 2 << 20
    t = (target_block_bytes // (vocab * 4)) // mult * mult
    t = max(t, mult)
    rows_ceil = -(-rows // mult) * mult
    t = min(t, rows_ceil)
    # Keep >= 2 grid steps when possible so both v7x TensorCores get work.
    while t > mult and -(-rows // t) < 2:
        t = max(mult, (t // 2) // mult * mult)
    if t > rows:  # tiny inputs: a full-extent block is always legal
        t = rows
    return int(t)


def scale_aware_grad_stable_relu(x, temperature=2.0, tile_rows=None):
    """Pallas implementation of ScaleAwareGradientStableReLUActivation.forward.

    x: (..., vocab) float array. Returns an array of the same shape/dtype.
    """
    orig_shape = x.shape
    vocab = orig_shape[-1]
    rows = 1
    for d in orig_shape[:-1]:
        rows *= d
    x2 = x.reshape(rows, vocab)

    itemsize = jnp.dtype(x.dtype).itemsize
    if tile_rows is None:
        tile_rows = _choose_tile_rows(rows, vocab, itemsize)

    # Ragged last block (rows % tile_rows != 0) is fine: rows are independent,
    # out-of-range rows are never written back, so no host-side padding needed.
    grid = (pl.cdiv(rows, tile_rows),)

    # VMEM budget: double-buffered in/out blocks + f32 temporaries + margin,
    # capped at 48 MiB so it stays inside v7x's 64 MiB physical VMEM.
    block_io = tile_rows * vocab * itemsize
    block_f32 = tile_rows * vocab * 4
    vmem_limit = int(min(max(4 * block_io + 8 * block_f32 + (4 << 20), 16 << 20),
                         48 << 20))

    out = pl.pallas_call(
        functools.partial(_scale_aware_kernel, temperature=float(temperature)),
        out_shape=jax.ShapeDtypeStruct((rows, vocab), x.dtype),
        grid_spec=pltpu.PrefetchScalarGridSpec(
            num_scalar_prefetch=0,
            grid=grid,
            in_specs=[pl.BlockSpec((tile_rows, vocab), lambda i: (i, 0))],
            out_specs=pl.BlockSpec((tile_rows, vocab), lambda i: (i, 0)),
        ),
        compiler_params=pltpu.CompilerParams(
            dimension_semantics=("parallel",),
            vmem_limit_bytes=vmem_limit),
    )(x2)

    return out.reshape(orig_shape)


def _reference(x, temperature=2.0):
    xf = x.astype(jnp.float32)
    norm = jnp.sqrt(jnp.sum(xf * xf, axis=-1, keepdims=True)) + 1e-10
    scale_factor = jnp.tanh(norm / temperature)
    scale = jnp.log1p(jnp.maximum(xf, 0.0) / norm) * scale_factor
    gate = jax.nn.sigmoid(norm - temperature)
    safe_scale = scale * (1.0 - gate) + gate
    bounded = jnp.tanh(xf / (1.0 + safe_scale))
    probs = (bounded + 1.0) / 2.0
    return (probs / (jnp.sum(probs, axis=-1, keepdims=True) + 1e-10)).astype(x.dtype)


# TODO(synk): OutputActivation.loss (clamped cross-entropy over these probs) is
# host/JAX-level glue and is intentionally not fused into the kernel.


if __name__ == "__main__":
    key = jax.random.PRNGKey(0)

    # Case 1: rows divide evenly into tiles (logits: batch=2, seq=8, vocab=128).
    batch, seq, vocab = 2, 8, 128
    x = jax.random.normal(key, (batch, seq, vocab), dtype=jnp.float32) * 3.0
    out = jax.block_until_ready(scale_aware_grad_stable_relu(x, temperature=2.0))
    ref = _reference(x, temperature=2.0)
    assert out.shape == x.shape
    max_err = float(jnp.max(jnp.abs(out - ref)))
    assert jnp.allclose(out, ref, atol=1e-4, rtol=1e-3), max_err
    assert jnp.allclose(jnp.sum(out, axis=-1), 1.0, atol=1e-3)

    # Case 2: ragged row count (exercises the cdiv grid / partial last block).
    x2 = jax.random.normal(jax.random.PRNGKey(1), (3, 5, vocab),
                           dtype=jnp.float32) * 2.0
    out2 = jax.block_until_ready(scale_aware_grad_stable_relu(x2, temperature=2.0))
    ref2 = _reference(x2, temperature=2.0)
    max_err2 = float(jnp.max(jnp.abs(out2 - ref2)))
    assert jnp.allclose(out2, ref2, atol=1e-4, rtol=1e-3), max_err2
    assert jnp.allclose(jnp.sum(out2, axis=-1), 1.0, atol=1e-3)

    print("KERNEL_OK")
</pallas_src>

<mosaic_0001>
module attributes {stable_mosaic.version = 11 : i64} {
  func.func @_scale_aware_kernel(%arg0: i32, %arg1: memref<8x128xf32, #tpu.memory_space<vmem>>, %arg2: memref<8x128xf32, #tpu.memory_space<vmem>>) attributes {dimension_semantics = [#tpu.dimension_semantics<parallel>], iteration_bounds = array<i64: 2>, scalar_prefetch = 0 : i64, scratch_operands = 0 : i64, tpu.core_type = #tpu.core_type<tc>, window_params = [{transform_indices = @transform_0, window_bounds = array<i64: 8, 128>}, {transform_indices = @transform_1, window_bounds = array<i64: 8, 128>}]} {
    %c0 = arith.constant 0 : index
    %c0_0 = arith.constant 0 : index
    %0 = vector.load %arg1[%c0, %c0_0] : memref<8x128xf32, #tpu.memory_space<vmem>>, vector<8x128xf32>
    %1 = arith.mulf %0, %0 : vector<8x128xf32>
    %cst = arith.constant dense<0.000000e+00> : vector<8xf32>
    %2 = vector.multi_reduction <add>, %1, %cst [1] : vector<8x128xf32> to vector<8xf32>
    %3 = vector.shape_cast %2 : vector<8xf32> to vector<8x1xf32>
    %4 = math.sqrt %3 : vector<8x1xf32>
    %cst_1 = arith.constant 1.000000e-10 : f32
    %5 = vector.broadcast %cst_1 : f32 to vector<8x1xf32>
    %6 = arith.addf %4, %5 : vector<8x1xf32>
    %7 = tpu.reciprocal %6 : vector<8x1xf32> -> vector<8x1xf32>
    %cst_2 = arith.constant 5.000000e-01 : f32
    %8 = vector.broadcast %cst_2 : f32 to vector<8x1xf32>
    %9 = arith.mulf %6, %8 : vector<8x1xf32>
    %10 = math.tanh %9 : vector<8x1xf32>
    %cst_3 = arith.constant 2.000000e+00 : f32
    %11 = vector.broadcast %cst_3 : f32 to vector<8x1xf32>
    %12 = arith.subf %6, %11 : vector<8x1xf32>
    %13 = arith.negf %12 : vector<8x1xf32>
    %14 = math.exp %13 : vector<8x1xf32>
    %cst_4 = arith.constant 1.000000e+00 : f32
    %15 = vector.broadcast %cst_4 : f32 to vector<8x1xf32>
    %16 = arith.addf %15, %14 : vector<8x1xf32>
    %17 = arith.divf %15, %16 : vector<8x1xf32>
    %cst_5 = arith.constant 0.000000e+00 : f32
    %18 = vector.broadcast %cst_5 : f32 to vector<8x128xf32>
    %19 = arith.maximumf %0, %18 : vector<8x128xf32>
    %20 = vector.broadcast %7 : vector<8x1xf32> to vector<8x128xf32>
    %21 = arith.mulf %19, %20 : vector<8x128xf32>
    %22 = math.log1p %21 : vector<8x128xf32>
    %23 = vector.broadcast %10 : vector<8x1xf32> to vector<8x128xf32>
    %24 = arith.mulf %22, %23 : vector<8x128xf32>
    %cst_6 = arith.constant 1.000000e+00 : f32
    %25 = vector.broadcast %cst_6 : f32 to vector<8x1xf32>
    %26 = arith.subf %25, %17 : vector<8x1xf32>
    %27 = vector.broadcast %26 : vector<8x1xf32> to vector<8x128xf32>
    %28 = arith.mulf %24, %27 : vector<8x128xf32>
    %29 = vector.broadcast %17 : vector<8x1xf32> to vector<8x128xf32>
    %30 = arith.addf %28, %29 : vector<8x128xf32>
    %cst_7 = arith.constant 1.000000e+00 : f32
    %31 = vector.broadcast %cst_7 : f32 to vector<8x128xf32>
    %32 = arith.addf %31, %30 : vector<8x128xf32>
    %33 = tpu.reciprocal %32 {approx = true} : vector<8x128xf32> -> vector<8x128xf32>
    %34 = arith.mulf %0, %33 : vector<8x128xf32>
    %35 = math.tanh %34 : vector<8x128xf32>
    %cst_8 = arith.constant 1.000000e+00 : f32
    %36 = vector.broadcast %cst_8 : f32 to vector<8x128xf32>
    %37 = arith.addf %35, %36 : vector<8x128xf32>
    %cst_9 = arith.constant 5.000000e-01 : f32
    %38 = vector.broadcast %cst_9 : f32 to vector<8x128xf32>
    %39 = arith.mulf %37, %38 : vector<8x128xf32>
    %cst_10 = arith.constant dense<0.000000e+00> : vector<8xf32>
    %40 = vector.multi_reduction <add>, %39, %cst_10 [1] : vector<8x128xf32> to vector<8xf32>
    %41 = vector.shape_cast %40 : vector<8xf32> to vector<8x1xf32>
    %cst_11 = arith.constant 1.000000e-10 : f32
    %42 = vector.broadcast %cst_11 : f32 to vector<8x1xf32>
    %43 = arith.addf %41, %42 : vector<8x1xf32>
    %44 = tpu.reciprocal %43 : vector<8x1xf32> -> vector<8x1xf32>
    %45 = vector.broadcast %44 : vector<8x1xf32> to vector<8x128xf32>
    %46 = arith.mulf %39, %45 : vector<8x128xf32>
    %c0_12 = arith.constant 0 : index
    %c0_13 = arith.constant 0 : index
    %47 = vector.load %arg2[%c0_12, %c0_13] : memref<8x128xf32, #tpu.memory_space<vmem>>, vector<8x128xf32>
    tpu.vector_store %arg2[%c0_12, %c0_13], %46 {strides = array<i32>} : memref<8x128xf32, #tpu.memory_space<vmem>>, vector<8x128xf32>,
    return
  }
  func.func @transform_0(%arg0: i32) -> (i32, i32) {
    %c0_i32 = arith.constant 0 : i32
    %c0_i32_0 = arith.constant 0 : i32
    return %arg0, %c0_i32 : i32, i32
  }
  func.func @transform_1(%arg0: i32) -> (i32, i32) {
    %c0_i32 = arith.constant 0 : i32
    %c0_i32_0 = arith.constant 0 : i32
    return %arg0, %c0_i32 : i32, i32
  }
}

</mosaic_0001>

<llo_original>
// kernel: tpu_custom_call.1
$region0: #{tpu_custom_call.1}
  #allocation0 [shape = 'u32[]', space=smem, size = 0x4, offset = 0x4, fixed_abs, tag = 'smem constant byte address 0x4 - core index']
  #allocation1 [shape = 'u32[144,128]{1,0:T(1,128)}', space=vmem, size = 0x12000, scoped, tag = 'internal scratch']
  %s0 = inlined_call_operand.hbm [shape: f32[16,128], index: 0, kind: input, shape index: {}]
  %s1 = inlined_call_operand.hbm [shape: f32[16,128], index: 1, kind: output, shape index: {}]
  %s2 = sld [smem:[#allocation0]]
  $region41: #{tpu_custom_call.1} parent=0
    _
  %s4 = ssub.s32 1, %s2
  %s5 = scalar_select 0, %s4, %s2
  $region1: #{tpu_custom_call.1} parent=0
    #allocation2 [shape = 'u8[8192]{0}', space=vmem, size = 0x2000, scoped, tag = 'input window, operand 0']
    #allocation3 [shape = 's32[2]{0}', space=sflag, size = 0x8, scoped, tag = 'scoped memory for tpu_custom_call.1']
    #allocation4 [shape = 's32[2]{0}', space=sflag, size = 0x8, scoped, tag = 'scoped memory for tpu_custom_call.1']
    #allocation5 [shape = 'u8[8192]{0}', space=vmem, size = 0x2000, scoped, tag = 'output window, operand 0']
    %6 = vsyncpa [#allocation3], 0
    %s7 = scalar_lea.sflag [#allocation3], 1
    %8 = vsyncpa %s7, 0
    %9 = vsyncpa [#allocation4], 0
    %s10 = scalar_lea.sflag [#allocation4], 1
    %11 = vsyncpa %s10, 0
    loop: start=0, step=1, limit=4
    $region2: #{tpu_custom_call.1} parent=1 // loop_pre_header
      _
    $region3: #{tpu_custom_call.1} parent=1 // loop_header
      %s13 = sphi 0, %s17
      %p14 = scmp.ge.s32.totalorder %s13, 4
      %s23 = sphi 0, %s25
      %s26 = sphi 0, %s23
      %s27 = sphi 0, %s26
      %s43 = sphi 0, %s27
      %s49 = sphi 0, %s51
      %s52 = sphi 0, %s49
      %s53 = sphi 0, %s52
      %s69 = sphi 0, %s53
    $region4: #{tpu_custom_call.1} parent=1 // loop_header_branch
      %16 = sbr.rel (%p14) target = $region8
    $region5: #{tpu_custom_call.1} parent=1 // loop_body
      %s18 = ssub.s32 %s13, 1
      %s19 = ssub.s32 %s13, 2
      %s20 = sadd.s32 %s13, 1
      %s21 = ssub.s32 %s13, %s20
      %p22 = scmp.eq.s32.totalorder %s21, 0
      %s24 = sadd.s32 %s23, 1
      %s25 = scalar_select %p22, %s23, %s24
      %p28 = pneg %p22
      %p29 = scmp.eq.s32.totalorder %s13, 1
      %p30 = por %p28, %p29
      %p31 = scmp.ne.s32.totalorder %s23, %s26
      %p32 = scmp.eq.s32.totalorder %s13, 0
      %p33 = por %p31, %p32
      %p34 = scmp.ne.s32.totalorder %s23, %s26
      %p35 = scmp.eq.s32.totalorder %s18, 1
      %p36 = por %p34, %p35
      %p37 = scmp.ne.s32.totalorder %s26, %s27
      %p38 = scmp.eq.s32.totalorder %s18, 0
      %p39 = por %p37, %p38
      %p40 = scmp.ne.s32.totalorder %s26, %s27
      %p41 = scmp.eq.s32.totalorder %s19, 1
      %p42 = por %p40, %p41
      %p44 = scmp.ne.s32.totalorder %s27, %s43
      %p45 = scmp.eq.s32.totalorder %s19, 0
      %p46 = por %p44, %p45
      %s47 = ssub.s32 %s13, %s20
      %p48 = scmp.eq.s32.totalorder %s47, 0
      %s50 = sadd.s32 %s49, 1
      %s51 = scalar_select %p48, %s49, %s50
      %p54 = pneg %p48
      %p55 = scmp.eq.s32.totalorder %s13, 1
      %p56 = por %p54, %p55
      %p57 = scmp.ne.s32.totalorder %s49, %s52
      %p58 = scmp.eq.s32.totalorder %s13, 0
      %p59 = por %p57, %p58
      %p60 = scmp.ne.s32.totalorder %s49, %s52
      %p61 = scmp.eq.s32.totalorder %s18, 1
      %p62 = por %p60, %p61
      %p63 = scmp.ne.s32.totalorder %s52, %s53
      %p64 = scmp.eq.s32.totalorder %s18, 0
      %p65 = por %p63, %p64
      %p66 = scmp.ne.s32.totalorder %s52, %s53
      %p67 = scmp.eq.s32.totalorder %s19, 1
      %p68 = por %p66, %p67
      %p70 = scmp.ne.s32.totalorder %s53, %s69
      %p71 = scmp.eq.s32.totalorder %s19, 0
      %p72 = por %p70, %p71
      %p73 = scmp.le.s32.totalorder 1, %s13
      %p74 = scmp.lt.s32.totalorder %s13, 3
      %p75 = pnand %p73, %p74
      %p76 = pneg %p75
      // Predicated region
      $region9: #{tpu_custom_call.1} parent=5 // pred_check
        _
      $region10: #{tpu_custom_call.1} parent=5 // pred_check_branch
        %78 = sbr.rel (%p75) target = $region12
      $region11: #{tpu_custom_call.1} parent=5 // pred_region
        %s79 = ssub.s32 %s13, 1
      $region12: #{tpu_custom_call.1} parent=5 // pred_fallthru
        _
      %p80 = scmp.lt.s32.totalorder %s13, 2
      // Predicated region
      $region13: #{tpu_custom_call.1} parent=5 // pred_check
        %p81 = pneg %p80
      $region14: #{tpu_custom_call.1} parent=5 // pred_check_branch
        %83 = sbr.rel (%p81) target = $region16
      $region15: #{tpu_custom_call.1} parent=5 // pred_region
        // Predicated region
        $region17: #{tpu_custom_call.1} parent=15 // pred_check
          %p84 = pneg %p33
        $region18: #{tpu_custom_call.1} parent=15 // pred_check_branch
          %86 = sbr.rel (%p84) target = $region20
        $region19: #{tpu_custom_call.1} parent=15 // pred_region
          %s87 = sand.u32 %s23, 1
          %s88 = scalar_lea.sflag [#allocation3], %s87
          %s89 = sand.u32 %s23, 1
          %s90 = smul.addr %s89, 8
          %s91 = scalar_lea.vmem [#allocation2], %s90
          %s93 = ssub.s32 128, 128
          %94 = vsyncadd %s88, %s93
          %s95 = smul.addr %s13, 128
          %s96 = scalar_lea.hbm %s0, %s95
          %s98 = sshll.u32 %s91, 4
          %s99 = int_to_ptr.vmem [resolvable:$true] %s98
          %101 = dma.hbm_to_vmem [thread:$0]  %s96, 128, %s99, %s88
        $region20: #{tpu_custom_call.1} parent=15 // pred_fallthru
          _
      $region16: #{tpu_custom_call.1} parent=5 // pred_fallthru
        _
      %p102 = scmp.le.s32.totalorder 1, %s13
      %p103 = scmp.lt.s32.totalorder %s13, 3
      %p104 = pnand %p102, %p103
      %p105 = pneg %p104
      // Predicated region
      $region21: #{tpu_custom_call.1} parent=5 // pred_check
        _
      $region22: #{tpu_custom_call.1} parent=5 // pred_check_branch
        %107 = sbr.rel (%p104) target = $region24
      $region23: #{tpu_custom_call.1} parent=5 // pred_region
        %s108 = ssub.s32 %s13, 1
        %s109 = sand.u32 %s26, 1
        %s110 = scalar_lea.sflag [#allocation3], %s109
        %s111 = sand.u32 %s26, 1
        %s112 = smul.addr %s111, 8
        %s113 = scalar_lea.vmem [#allocation2], %s112
        // Predicated region
        $region25: #{tpu_custom_call.1} parent=23 // pred_check
          %p114 = pneg %p39
        $region26: #{tpu_custom_call.1} parent=23 // pred_check_branch
          %116 = sbr.rel (%p114) target = $region28
        $region27: #{tpu_custom_call.1} parent=23 // pred_region
          %117 = dma.done %s110, 128
        $region28: #{tpu_custom_call.1} parent=23 // pred_fallthru
          _
        %s118 = sand.u32 %s26, 1
        %s119 = scalar_lea.sflag [#allocation3], %s118
        %s120 = sand.u32 %s26, 1
        %s121 = smul.addr %s120, 8
        %s122 = scalar_lea.vmem [#allocation2], %s121
        %p123 = pneg %p39
        %p124 = pneg %p36
        %p125 = pneg %p65
        %p126 = pneg %p62
        %s127 = sand.u32 %s52, 1
        %s128 = scalar_lea.sflag [#allocation4], %s127
        %s129 = sand.u32 %s52, 1
        %s130 = smul.addr %s129, 8
        %s131 = scalar_lea.vmem [#allocation5], %s130
        %v132 = vld [vmem:[%s113] sm:$0xff]
        %v133 = vmul.f32 %v132, %v132
        %134 = vadd.xlane.f32.xlu0 %v133
        %v135 = vpop.xlane.xlu0 %134
        %v136 = vrsqrt.pop %v135
        %v137 = vmul.f32 %v135, %v136
        %vm138 = vcmp.eq.f32.partialorder %v135, inf
        %v139 = vsel %vm138, %v135, %v137
        %vm140 = vcmp.eq.f32.partialorder %v135, 0.0
        %v141 = vand.u32 %v135, 2147483648
        %v142 = vsel %vm140, %v141, %v139
        %v143 = vadd.f32 %v142, 1e-10
        %v144 = vrcp.pop %v143
        %v145 = vmul.f32 %v143, 0.5
        %v146 = vtanh.pop %v145
        %v147 = vsub.f32 %v143, 2.0
        %v148 = vxor.u32 %v147, 2147483648
        %v149 = vmul.f32 %v148, 1.442695
        %v150 = vpow.pop %v149
        %v151 = vadd.f32 %v150, 1.0
        %v152 = vrcp.pop %v151
        %v153 = vmul.f32 1.0, %v152
        %v154 = vmax.f32 %v132, 0.0
        %v155 = vmul.f32 %v154, %v144
        %v156 = vadd.f32 %v155, 1.0
        %v157 = vlog2.pop %v156
        %v158 = vmul.f32 %v157, 0.6931472
        %v159 = vmul.f32 -0.5, %v155
        %v160 = vadd.f32 %v159, 1.0
        %v161 = vmul.f32 %v160, %v155
        %v162 = vand.u32 2147483647, %v155
        %vm163 = vcmp.lt.f32.partialorder %v162, 0.0004427343
        %v164 = vsel %vm163, %v161, %v158
        %v165 = vmul.f32 %v164, %v146
        %v166 = vsub.f32 1.0, %v153
        %v167 = vmul.f32 %v165, %v166
        %v168 = vadd.f32 %v167, %v153
        %v169 = vadd.f32 %v168, 1.0
        %v170 = vrcp.pop %v169
        %v171 = vmul.f32 %v132, %v170
        %v172 = vtanh.pop %v171
        %v173 = vadd.f32 %v172, 1.0
        %v174 = vmul.f32 %v173, 0.5
        %175 = vadd.xlane.f32.xlu0 %v174
        %v176 = vpop.xlane.xlu0 %175
        %v177 = vadd.f32 %v176, 1e-10
        %v178 = vrcp.pop %v177
        %v179 = vmul.f32 %v174, %v178
        %180 = vst [vmem:[%s131] sm:$0xff] %v179
        %s181 = sand.u32 %s52, 1
        %s182 = scalar_lea.sflag [#allocation4], %s181
        %s183 = sand.u32 %s52, 1
        %s184 = smul.addr %s183, 8
        %s185 = scalar_lea.vmem [#allocation5], %s184
        // Predicated region
        $region29: #{tpu_custom_call.1} parent=23 // pred_check
          %p186 = pneg %p62
        $region30: #{tpu_custom_call.1} parent=23 // pred_check_branch
          %188 = sbr.rel (%p186) target = $region32
        $region31: #{tpu_custom_call.1} parent=23 // pred_region
          %s190 = ssub.s32 128, 128
          %191 = vsyncadd %s182, %s190
          %s192 = smul.addr %s18, 128
          %s193 = scalar_lea.hbm %s1, %s192
          %s195 = sshll.u32 %s185, 4
          %s196 = int_to_ptr.vmem [resolvable:$true] %s195
          %198 = dma.vmem_to_hbm [thread:$0]  %s196, 128, %s193, %s182
        $region32: #{tpu_custom_call.1} parent=23 // pred_fallthru
          _
      $region24: #{tpu_custom_call.1} parent=5 // pred_fallthru
        _
      %p199 = scmp.le.s32.totalorder 2, %s13
      // Predicated region
      $region33: #{tpu_custom_call.1} parent=5 // pred_check
        %p200 = pneg %p199
      $region34: #{tpu_custom_call.1} parent=5 // pred_check_branch
        %202 = sbr.rel (%p200) target = $region36
      $region35: #{tpu_custom_call.1} parent=5 // pred_region
        %s203 = ssub.s32 %s13, 2
        // Predicated region
        $region37: #{tpu_custom_call.1} parent=35 // pred_check
          %p204 = pneg %p68
        $region38: #{tpu_custom_call.1} parent=35 // pred_check_branch
          %206 = sbr.rel (%p204) target = $region40
        $region39: #{tpu_custom_call.1} parent=35 // pred_region
          %s207 = sand.u32 %s53, 1
          %s208 = scalar_lea.sflag [#allocation4], %s207
          %s209 = sand.u32 %s53, 1
          %s210 = smul.addr %s209, 8
          %s211 = scalar_lea.vmem [#allocation5], %s210
          %212 = dma.done %s208, 128
        $region40: #{tpu_custom_call.1} parent=35 // pred_fallthru
          _
      $region36: #{tpu_custom_call.1} parent=5 // pred_fallthru
        _
    $region6: #{tpu_custom_call.1} parent=1 // loop_footer
      %s17 = sadd.s32 1, %s13
    $region7: #{tpu_custom_call.1} parent=1 // loop_footer_branch
      %12 = sbr.rel target = $region3
    $region8: #{tpu_custom_call.1} parent=1 // loop_exit
      _
    %213 = vsyncpa [#allocation3], 1
    %s214 = scalar_lea.sflag [#allocation3], 1
    %215 = vsyncpa %s214, 1
    %216 = vsyncpa [#allocation4], 1
    %s217 = scalar_lea.sflag [#allocation4], 1
    %218 = vsyncpa %s217, 1

</llo_original>
